<compile_context>
chip_gen: v7x
topology: tpu7x:2x2x1
jax: 0.10.0
libtpu: 0.0.40
codegen_flags: <defaults>
</compile_context>

<pallas_src>
import math

import jax
import jax.numpy as jnp
from jax import lax
from jax.experimental import pallas as pl
from jax.experimental.pallas import tpu as pltpu

# ---- problem sizes (small, consistent with (batch, seq, hidden)) ----
BATCH, SEQ, HID, STATE = 2, 8, 32, 16
R_MIN, R_MAX, PHASE_MAX = 0.4, 0.9, 6.2
LN_EPS = 1e-5

ROWS = SEQ * BATCH                 # time-major flattened rows (row = t*BATCH + b)
K_READ = 2 * STATE + HID           # readout contraction dim: [xs_re | xs_im | u]
WSLAB_ROWS = HID + K_READ + HID    # 32 (B_cat) + 64 (C_ext) + 32 (W_gate^T) = 128
INV_SQRT2 = 1.0 / math.sqrt(2.0)


def lru_block_kernel(
    x_ref,      # (ROWS, HID)        time-major flattened input
    vecs_ref,   # (5, HID)           rows: [ln_w, ln_b, gate_bias, lam_re(pad), lam_im(pad)]
    wslab_ref,  # (WSLAB_ROWS, HID)  rows 0:32 B_cat, 32:96 C_ext, 96:128 W_gate^T
    o_ref,      # (ROWS, HID)
    xu_scratch, # (ROWS, K_READ)     VMEM scratch: cols 0:2S packed state, 2S: u
):
    x = x_ref[...]                                  # (ROWS, HID)

    vecs = vecs_ref[...]
    ln_w = vecs[0:1, :]
    ln_b = vecs[1:2, :]
    b_gate = vecs[2:3, :]
    lam_re = vecs[3:4, :STATE]                      # (1, STATE)
    lam_im = vecs[4:5, :STATE]

    # ---- LayerNorm over hidden dim (biased variance, matches nn.LayerNorm) ----
    mean = jnp.mean(x, axis=-1, keepdims=True)
    var = jnp.mean((x - mean) ** 2, axis=-1, keepdims=True)
    u = (x - mean) * lax.rsqrt(var + LN_EPS) * ln_w + ln_b

    # u feeds the fused readout (D-skip folded into C_ext) via the scratch cols.
    xu_scratch[:, 2 * STATE:] = u

    # ---- fused LRU input projection: u @ [Re(Bγ)^T | Im(Bγ)^T], one matmul ----
    bu = jnp.dot(u, wslab_ref[0:HID, :], preferred_element_type=jnp.float32)
    bu_re = bu[:, :STATE]                           # (ROWS, STATE)
    bu_im = bu[:, STATE:]

    # ---- diagonal complex recurrence x_t = lambda * x_{t-1} + bu_t ----
    # Unrolled over SEQ; state stays in vregs; each step writes its packed
    # [re | im] rows into the resident scratch with static offsets (no concats).
    xr = jnp.zeros((BATCH, STATE), jnp.float32)
    xi = jnp.zeros((BATCH, STATE), jnp.float32)
    for t in range(SEQ):
        r0 = t * BATCH
        nr = lam_re * xr - lam_im * xi + bu_re[r0:r0 + BATCH, :]
        ni = lam_re * xi + lam_im * xr + bu_im[r0:r0 + BATCH, :]
        xu_scratch[r0:r0 + BATCH, 0:STATE] = nr
        xu_scratch[r0:r0 + BATCH, STATE:2 * STATE] = ni
        xr, xi = nr, ni

    # ---- fused readout (K=64, single MXU pass):
    #   [xs_re | xs_im | u] @ [C_re^T ; -C_im^T ; diag(D)] = Re(xs @ C^T) + u*D
    y = jnp.dot(
        xu_scratch[...],
        wslab_ref[HID:HID + K_READ, :],
        preferred_element_type=jnp.float32,
    )

    # ---- GELU (exact erf form, matches torch.nn.GELU default) ----
    y = 0.5 * y * (1.0 + lax.erf(y * jnp.float32(INV_SQRT2)))
    # dropout: eval mode -> identity

    # ---- state-mixing gate: y * sigmoid(y @ W^T + b) (W pre-transposed) ----
    gate = jax.nn.sigmoid(
        jnp.dot(y, wslab_ref[HID + K_READ:, :], preferred_element_type=jnp.float32)
        + b_gate
    )

    # ---- residual with original (pre-norm) input; single full store ----
    o_ref[...] = y * gate + x


@jax.jit
def lru_block_forward(x, vecs, wslab):
    """Single-instance path: gridless, fully VMEM-resident (per review advice)."""
    x_tm = jnp.transpose(x, (1, 0, 2)).reshape(ROWS, HID)   # time-major flatten
    vmem = pl.BlockSpec(memory_space=pltpu.MemorySpace.VMEM)
    out_tm = pl.pallas_call(
        lru_block_kernel,
        out_shape=jax.ShapeDtypeStruct((ROWS, HID), jnp.float32),
        in_specs=[vmem, vmem, vmem],
        out_specs=vmem,
        scratch_shapes=[pltpu.VMEM((ROWS, K_READ), jnp.float32)],
    )(x_tm, vecs, wslab)
    return out_tm.reshape(SEQ, BATCH, HID).transpose(1, 0, 2)


@jax.jit
def lru_block_forward_batched(xs, vecs, wslab):
    """N independent (BATCH, SEQ, HID) instances in ONE pallas_call.

    Amortizes launch + parameter DMA: the two parameter slabs have constant
    index_maps (loaded once, stay VMEM-resident) while x/o tiles are
    double-buffered over the grid; the grid axis is 'parallel' so v7x splits
    it across its two TensorCores.
    """
    n = xs.shape[0]
    x_tm = jnp.transpose(xs, (0, 2, 1, 3)).reshape(n, ROWS, HID)
    out_tm = pl.pallas_call(
        lru_block_kernel,
        out_shape=jax.ShapeDtypeStruct((n, ROWS, HID), jnp.float32),
        grid=(n,),
        in_specs=[
            pl.BlockSpec((None, ROWS, HID), lambda i: (i, 0, 0)),
            pl.BlockSpec((5, HID), lambda i: (0, 0)),
            pl.BlockSpec((WSLAB_ROWS, HID), lambda i: (0, 0)),
        ],
        out_specs=pl.BlockSpec((None, ROWS, HID), lambda i: (i, 0, 0)),
        scratch_shapes=[pltpu.VMEM((ROWS, K_READ), jnp.float32)],
        compiler_params=pltpu.CompilerParams(dimension_semantics=("parallel",)),
    )(x_tm, vecs, wslab)
    return out_tm.reshape(n, SEQ, BATCH, HID).transpose(0, 2, 1, 3)


def make_params(key):
    """Deterministic parameter init mirroring LRU.__init__ / LRUBlock.__init__."""
    ks = jax.random.split(key, 9)

    r_unit = jax.random.uniform(ks[0], (STATE,), jnp.float32)
    r_init = r_unit * (R_MAX**2 - R_MIN**2) + R_MIN**2
    log_nu = jnp.log(-0.5 * jnp.log(r_init))
    theta_init = PHASE_MAX * jax.random.uniform(ks[1], (STATE,), jnp.float32)
    log_theta = jnp.log(theta_init)

    scale = 1.0 / math.sqrt(2.0 * HID)
    b_re = jax.random.normal(ks[2], (STATE, HID), jnp.float32) * scale
    b_im = jax.random.normal(ks[3], (STATE, HID), jnp.float32) * scale
    c_re = jax.random.normal(ks[4], (HID, STATE), jnp.float32) * scale
    c_im = jax.random.normal(ks[5], (HID, STATE), jnp.float32) * scale
    d = jax.random.normal(ks[6], (HID,), jnp.float32)

    lam_abs = jnp.exp(-jnp.exp(log_nu))
    gamma = jnp.sqrt(1.0 - lam_abs**2)
    theta = jnp.exp(log_theta)
    lam_re = lam_abs * jnp.cos(theta)
    lam_im = lam_abs * jnp.sin(theta)

    bnr = b_re * gamma[:, None]          # Re(B * gamma)
    bni = b_im * gamma[:, None]          # Im(B * gamma)

    ln_w = jnp.ones((HID,), jnp.float32)
    ln_b = jnp.zeros((HID,), jnp.float32)

    bound = 1.0 / math.sqrt(HID)
    w_gate = jax.random.uniform(ks[7], (HID, HID), jnp.float32, -bound, bound)
    b_gate = jax.random.uniform(ks[8], (HID,), jnp.float32, -bound, bound)

    return (ln_w, ln_b, bnr, bni, lam_re, lam_im, c_re, c_im, d, w_gate, b_gate)


def prepare_kernel_inputs(raw):
    """Coalesce all parameters into two slabs (2 input DMAs total besides x)."""
    (ln_w, ln_b, bnr, bni, lam_re, lam_im, c_re, c_im, d, w_gate, b_gate) = raw
    pad = HID - STATE
    vecs = jnp.stack(
        [ln_w, ln_b, b_gate, jnp.pad(lam_re, (0, pad)), jnp.pad(lam_im, (0, pad))],
        axis=0,
    )                                                        # (5, HID)
    b_cat = jnp.concatenate([bnr.T, bni.T], axis=1)          # (HID, 2*STATE)
    c_ext = jnp.concatenate([c_re.T, -c_im.T, jnp.diag(d)], axis=0)  # (K_READ, HID)
    wslab = jnp.concatenate([b_cat, c_ext, w_gate.T], axis=0)        # (128, HID)
    return vecs, wslab


def reference_forward(x, raw):
    """Pure-JAX (complex) reference matching the PyTorch module semantics."""
    (ln_w, ln_b, bnr, bni, lam_re, lam_im, c_re, c_im, d, w_gate, b_gate) = raw
    lam = (lam_re + 1j * lam_im).astype(jnp.complex64)
    bn = (bnr + 1j * bni).astype(jnp.complex64)
    c = (c_re + 1j * c_im).astype(jnp.complex64)

    mean = x.mean(-1, keepdims=True)
    var = ((x - mean) ** 2).mean(-1, keepdims=True)
    u = (x - mean) / jnp.sqrt(var + LN_EPS) * ln_w + ln_b

    bu = u.astype(jnp.complex64) @ bn.T                      # (B, S, STATE)

    def scan_fn(carry, bu_t):
        x_t = lam * carry + bu_t
        return x_t, x_t

    _, xs = lax.scan(scan_fn, jnp.zeros((x.shape[0], STATE), jnp.complex64),
                     jnp.swapaxes(bu, 0, 1))
    xs = jnp.swapaxes(xs, 0, 1)                              # (B, S, STATE)

    y = jnp.real(xs @ c.T) + u * d
    y = 0.5 * y * (1.0 + lax.erf(y / jnp.sqrt(2.0)))
    y = y * jax.nn.sigmoid(y @ w_gate.T + b_gate)
    return y + x


if __name__ == "__main__":
    key = jax.random.PRNGKey(0)
    k_param, k_x, k_xs = jax.random.split(key, 3)
    raw_params = make_params(k_param)
    vecs, wslab = prepare_kernel_inputs(raw_params)

    # --- single-instance path (gridless) ---
    x = jax.random.normal(k_x, (BATCH, SEQ, HID), jnp.float32)
    out = jax.block_until_ready(lru_block_forward(x, vecs, wslab))
    ref = jax.block_until_ready(reference_forward(x, raw_params))
    assert out.shape == (BATCH, SEQ, HID)
    assert jnp.allclose(out, ref, atol=1e-4, rtol=1e-4), (
        f"single-instance max abs err {jnp.max(jnp.abs(out - ref))}"
    )

    # --- batched path (grid over N independent instances, weights resident) ---
    n = 4
    xs = jax.random.normal(k_xs, (n, BATCH, SEQ, HID), jnp.float32)
    outs = jax.block_until_ready(lru_block_forward_batched(xs, vecs, wslab))
    refs = jax.block_until_ready(
        jax.vmap(lambda xx: reference_forward(xx, raw_params))(xs)
    )
    assert outs.shape == (n, BATCH, SEQ, HID)
    assert jnp.allclose(outs, refs, atol=1e-4, rtol=1e-4), (
        f"batched max abs err {jnp.max(jnp.abs(outs - refs))}"
    )

    print("KERNEL_OK")
</pallas_src>

<mosaic_0001>
module attributes {stable_mosaic.version = 11 : i64} {
  func.func @lru_block_kernel(%arg0: memref<16x32xf32, #tpu.memory_space<vmem>>, %arg1: memref<5x32xf32, #tpu.memory_space<vmem>>, %arg2: memref<128x32xf32, #tpu.memory_space<vmem>>, %arg3: memref<16x32xf32, #tpu.memory_space<vmem>>, %arg4: memref<16x64xf32, #tpu.memory_space<vmem>>) attributes {dimension_semantics = [], scalar_prefetch = 0 : i64, scratch_operands = 1 : i64, tpu.core_type = #tpu.core_type<tc>} {
    %c0 = arith.constant 0 : index
    %c0_0 = arith.constant 0 : index
    %0 = vector.load %arg0[%c0, %c0_0] : memref<16x32xf32, #tpu.memory_space<vmem>>, vector<16x32xf32>
    %c0_1 = arith.constant 0 : index
    %c0_2 = arith.constant 0 : index
    %1 = vector.load %arg1[%c0_1, %c0_2] : memref<5x32xf32, #tpu.memory_space<vmem>>, vector<5x32xf32>
    %2 = vector.extract_strided_slice %1 {offsets = [0, 0], sizes = [1, 32], strides = [1, 1]} : vector<5x32xf32> to vector<1x32xf32>
    %3 = vector.extract_strided_slice %1 {offsets = [1, 0], sizes = [1, 32], strides = [1, 1]} : vector<5x32xf32> to vector<1x32xf32>
    %4 = vector.extract_strided_slice %1 {offsets = [2, 0], sizes = [1, 32], strides = [1, 1]} : vector<5x32xf32> to vector<1x32xf32>
    %5 = vector.extract_strided_slice %1 {offsets = [3, 0], sizes = [1, 16], strides = [1, 1]} : vector<5x32xf32> to vector<1x16xf32>
    %6 = vector.extract_strided_slice %1 {offsets = [4, 0], sizes = [1, 16], strides = [1, 1]} : vector<5x32xf32> to vector<1x16xf32>
    %cst = arith.constant dense<0.000000e+00> : vector<16xf32>
    %7 = vector.multi_reduction <add>, %0, %cst [1] : vector<16x32xf32> to vector<16xf32>
    %8 = vector.shape_cast %7 : vector<16xf32> to vector<16x1xf32>
    %cst_3 = arith.constant 3.200000e+01 : f32
    %9 = vector.broadcast %cst_3 : f32 to vector<16x1xf32>
    %10 = arith.divf %8, %9 : vector<16x1xf32>
    %11 = vector.broadcast %10 : vector<16x1xf32> to vector<16x32xf32>
    %12 = arith.subf %0, %11 : vector<16x32xf32>
    %13 = arith.mulf %12, %12 : vector<16x32xf32>
    %cst_4 = arith.constant dense<0.000000e+00> : vector<16xf32>
    %14 = vector.multi_reduction <add>, %13, %cst_4 [1] : vector<16x32xf32> to vector<16xf32>
    %15 = vector.shape_cast %14 : vector<16xf32> to vector<16x1xf32>
    %cst_5 = arith.constant 3.200000e+01 : f32
    %16 = vector.broadcast %cst_5 : f32 to vector<16x1xf32>
    %17 = arith.divf %15, %16 : vector<16x1xf32>
    %18 = vector.broadcast %10 : vector<16x1xf32> to vector<16x32xf32>
    %19 = arith.subf %0, %18 : vector<16x32xf32>
    %cst_6 = arith.constant 9.99999974E-6 : f32
    %20 = vector.broadcast %cst_6 : f32 to vector<16x1xf32>
    %21 = arith.addf %17, %20 : vector<16x1xf32>
    %22 = math.rsqrt %21 : vector<16x1xf32>
    %23 = vector.broadcast %22 : vector<16x1xf32> to vector<16x32xf32>
    %24 = arith.mulf %19, %23 : vector<16x32xf32>
    %25 = vector.broadcast %2 : vector<1x32xf32> to vector<16x32xf32>
    %26 = arith.mulf %24, %25 : vector<16x32xf32>
    %27 = vector.broadcast %3 : vector<1x32xf32> to vector<16x32xf32>
    %28 = arith.addf %26, %27 : vector<16x32xf32>
    %c0_7 = arith.constant 0 : index
    %c32 = arith.constant 32 : index
    %29 = vector.load %arg4[%c0_7, %c32] : memref<16x64xf32, #tpu.memory_space<vmem>>, vector<16x32xf32>
    tpu.vector_store %arg4[%c0_7, %c32], %28 {strides = array<i32>} : memref<16x64xf32, #tpu.memory_space<vmem>>, vector<16x32xf32>,
    %c0_8 = arith.constant 0 : index
    %c0_9 = arith.constant 0 : index
    %30 = vector.load %arg2[%c0_8, %c0_9] : memref<128x32xf32, #tpu.memory_space<vmem>>, vector<32x32xf32>
    %cst_10 = arith.constant dense<0.000000e+00> : vector<16x32xf32>
    %31 = tpu.matmul %28, %30, %cst_10 {dimension_numbers = #tpu.dot_dimension_numbers<[1], [0], [0], [1], [0, 0, 1, 1], [], []>} : vector<16x32xf32>, vector<32x32xf32>, vector<16x32xf32> -> vector<16x32xf32>
    %32 = vector.extract_strided_slice %31 {offsets = [0, 0], sizes = [16, 16], strides = [1, 1]} : vector<16x32xf32> to vector<16x16xf32>
    %33 = vector.extract_strided_slice %31 {offsets = [0, 16], sizes = [16, 16], strides = [1, 1]} : vector<16x32xf32> to vector<16x16xf32>
    %cst_11 = arith.constant 0.000000e+00 : f32
    %34 = vector.broadcast %cst_11 : f32 to vector<2x16xf32>
    %cst_12 = arith.constant 0.000000e+00 : f32
    %35 = vector.broadcast %cst_12 : f32 to vector<2x16xf32>
    %36 = vector.broadcast %5 : vector<1x16xf32> to vector<2x16xf32>
    %37 = arith.mulf %36, %34 : vector<2x16xf32>
    %38 = vector.broadcast %6 : vector<1x16xf32> to vector<2x16xf32>
    %39 = arith.mulf %38, %35 : vector<2x16xf32>
    %40 = arith.subf %37, %39 : vector<2x16xf32>
    %41 = vector.extract_strided_slice %32 {offsets = [0, 0], sizes = [2, 16], strides = [1, 1]} : vector<16x16xf32> to vector<2x16xf32>
    %42 = arith.addf %40, %41 : vector<2x16xf32>
    %43 = vector.broadcast %5 : vector<1x16xf32> to vector<2x16xf32>
    %44 = arith.mulf %43, %35 : vector<2x16xf32>
    %45 = vector.broadcast %6 : vector<1x16xf32> to vector<2x16xf32>
    %46 = arith.mulf %45, %34 : vector<2x16xf32>
    %47 = arith.addf %44, %46 : vector<2x16xf32>
    %48 = vector.extract_strided_slice %33 {offsets = [0, 0], sizes = [2, 16], strides = [1, 1]} : vector<16x16xf32> to vector<2x16xf32>
    %49 = arith.addf %47, %48 : vector<2x16xf32>
    %c0_13 = arith.constant 0 : index
    %c0_14 = arith.constant 0 : index
    %50 = vector.load %arg4[%c0_13, %c0_14] : memref<16x64xf32, #tpu.memory_space<vmem>>, vector<2x16xf32>
    tpu.vector_store %arg4[%c0_13, %c0_14], %42 {strides = array<i32>} : memref<16x64xf32, #tpu.memory_space<vmem>>, vector<2x16xf32>,
    %c0_15 = arith.constant 0 : index
    %c16 = arith.constant 16 : index
    %51 = vector.load %arg4[%c0_15, %c16] : memref<16x64xf32, #tpu.memory_space<vmem>>, vector<2x16xf32>
    tpu.vector_store %arg4[%c0_15, %c16], %49 {strides = array<i32>} : memref<16x64xf32, #tpu.memory_space<vmem>>, vector<2x16xf32>,
    %52 = vector.broadcast %5 : vector<1x16xf32> to vector<2x16xf32>
    %53 = arith.mulf %52, %42 : vector<2x16xf32>
    %54 = vector.broadcast %6 : vector<1x16xf32> to vector<2x16xf32>
    %55 = arith.mulf %54, %49 : vector<2x16xf32>
    %56 = arith.subf %53, %55 : vector<2x16xf32>
    %57 = vector.extract_strided_slice %32 {offsets = [2, 0], sizes = [2, 16], strides = [1, 1]} : vector<16x16xf32> to vector<2x16xf32>
    %58 = arith.addf %56, %57 : vector<2x16xf32>
    %59 = vector.broadcast %5 : vector<1x16xf32> to vector<2x16xf32>
    %60 = arith.mulf %59, %49 : vector<2x16xf32>
    %61 = vector.broadcast %6 : vector<1x16xf32> to vector<2x16xf32>
    %62 = arith.mulf %61, %42 : vector<2x16xf32>
    %63 = arith.addf %60, %62 : vector<2x16xf32>
    %64 = vector.extract_strided_slice %33 {offsets = [2, 0], sizes = [2, 16], strides = [1, 1]} : vector<16x16xf32> to vector<2x16xf32>
    %65 = arith.addf %63, %64 : vector<2x16xf32>
    %c2 = arith.constant 2 : index
    %c0_16 = arith.constant 0 : index
    %66 = vector.load %arg4[%c2, %c0_16] : memref<16x64xf32, #tpu.memory_space<vmem>>, vector<2x16xf32>
    tpu.vector_store %arg4[%c2, %c0_16], %58 {strides = array<i32>} : memref<16x64xf32, #tpu.memory_space<vmem>>, vector<2x16xf32>,
    %c2_17 = arith.constant 2 : index
    %c16_18 = arith.constant 16 : index
    %67 = vector.load %arg4[%c2_17, %c16_18] : memref<16x64xf32, #tpu.memory_space<vmem>>, vector<2x16xf32>
    tpu.vector_store %arg4[%c2_17, %c16_18], %65 {strides = array<i32>} : memref<16x64xf32, #tpu.memory_space<vmem>>, vector<2x16xf32>,
    %68 = vector.broadcast %5 : vector<1x16xf32> to vector<2x16xf32>
    %69 = arith.mulf %68, %58 : vector<2x16xf32>
    %70 = vector.broadcast %6 : vector<1x16xf32> to vector<2x16xf32>
    %71 = arith.mulf %70, %65 : vector<2x16xf32>
    %72 = arith.subf %69, %71 : vector<2x16xf32>
    %73 = vector.extract_strided_slice %32 {offsets = [4, 0], sizes = [2, 16], strides = [1, 1]} : vector<16x16xf32> to vector<2x16xf32>
    %74 = arith.addf %72, %73 : vector<2x16xf32>
    %75 = vector.broadcast %5 : vector<1x16xf32> to vector<2x16xf32>
    %76 = arith.mulf %75, %65 : vector<2x16xf32>
    %77 = vector.broadcast %6 : vector<1x16xf32> to vector<2x16xf32>
    %78 = arith.mulf %77, %58 : vector<2x16xf32>
    %79 = arith.addf %76, %78 : vector<2x16xf32>
    %80 = vector.extract_strided_slice %33 {offsets = [4, 0], sizes = [2, 16], strides = [1, 1]} : vector<16x16xf32> to vector<2x16xf32>
    %81 = arith.addf %79, %80 : vector<2x16xf32>
    %c4 = arith.constant 4 : index
    %c0_19 = arith.constant 0 : index
    %82 = vector.load %arg4[%c4, %c0_19] : memref<16x64xf32, #tpu.memory_space<vmem>>, vector<2x16xf32>
    tpu.vector_store %arg4[%c4, %c0_19], %74 {strides = array<i32>} : memref<16x64xf32, #tpu.memory_space<vmem>>, vector<2x16xf32>,
    %c4_20 = arith.constant 4 : index
    %c16_21 = arith.constant 16 : index
    %83 = vector.load %arg4[%c4_20, %c16_21] : memref<16x64xf32, #tpu.memory_space<vmem>>, vector<2x16xf32>
    tpu.vector_store %arg4[%c4_20, %c16_21], %81 {strides = array<i32>} : memref<16x64xf32, #tpu.memory_space<vmem>>, vector<2x16xf32>,
    %84 = vector.broadcast %5 : vector<1x16xf32> to vector<2x16xf32>
    %85 = arith.mulf %84, %74 : vector<2x16xf32>
    %86 = vector.broadcast %6 : vector<1x16xf32> to vector<2x16xf32>
    %87 = arith.mulf %86, %81 : vector<2x16xf32>
    %88 = arith.subf %85, %87 : vector<2x16xf32>
    %89 = vector.extract_strided_slice %32 {offsets = [6, 0], sizes = [2, 16], strides = [1, 1]} : vector<16x16xf32> to vector<2x16xf32>
    %90 = arith.addf %88, %89 : vector<2x16xf32>
    %91 = vector.broadcast %5 : vector<1x16xf32> to vector<2x16xf32>
    %92 = arith.mulf %91, %81 : vector<2x16xf32>
    %93 = vector.broadcast %6 : vector<1x16xf32> to vector<2x16xf32>
    %94 = arith.mulf %93, %74 : vector<2x16xf32>
    %95 = arith.addf %92, %94 : vector<2x16xf32>
    %96 = vector.extract_strided_slice %33 {offsets = [6, 0], sizes = [2, 16], strides = [1, 1]} : vector<16x16xf32> to vector<2x16xf32>
    %97 = arith.addf %95, %96 : vector<2x16xf32>
    %c6 = arith.constant 6 : index
    %c0_22 = arith.constant 0 : index
    %98 = vector.load %arg4[%c6, %c0_22] : memref<16x64xf32, #tpu.memory_space<vmem>>, vector<2x16xf32>
    tpu.vector_store %arg4[%c6, %c0_22], %90 {strides = array<i32>} : memref<16x64xf32, #tpu.memory_space<vmem>>, vector<2x16xf32>,
    %c6_23 = arith.constant 6 : index
    %c16_24 = arith.constant 16 : index
    %99 = vector.load %arg4[%c6_23, %c16_24] : memref<16x64xf32, #tpu.memory_space<vmem>>, vector<2x16xf32>
    tpu.vector_store %arg4[%c6_23, %c16_24], %97 {strides = array<i32>} : memref<16x64xf32, #tpu.memory_space<vmem>>, vector<2x16xf32>,
    %100 = vector.broadcast %5 : vector<1x16xf32> to vector<2x16xf32>
    %101 = arith.mulf %100, %90 : vector<2x16xf32>
    %102 = vector.broadcast %6 : vector<1x16xf32> to vector<2x16xf32>
    %103 = arith.mulf %102, %97 : vector<2x16xf32>
    %104 = arith.subf %101, %103 : vector<2x16xf32>
    %105 = vector.extract_strided_slice %32 {offsets = [8, 0], sizes = [2, 16], strides = [1, 1]} : vector<16x16xf32> to vector<2x16xf32>
    %106 = arith.addf %104, %105 : vector<2x16xf32>
    %107 = vector.broadcast %5 : vector<1x16xf32> to vector<2x16xf32>
    %108 = arith.mulf %107, %97 : vector<2x16xf32>
    %109 = vector.broadcast %6 : vector<1x16xf32> to vector<2x16xf32>
    %110 = arith.mulf %109, %90 : vector<2x16xf32>
    %111 = arith.addf %108, %110 : vector<2x16xf32>
    %112 = vector.extract_strided_slice %33 {offsets = [8, 0], sizes = [2, 16], strides = [1, 1]} : vector<16x16xf32> to vector<2x16xf32>
    %113 = arith.addf %111, %112 : vector<2x16xf32>
    %c8 = arith.constant 8 : index
    %c0_25 = arith.constant 0 : index
    %114 = vector.load %arg4[%c8, %c0_25] : memref<16x64xf32, #tpu.memory_space<vmem>>, vector<2x16xf32>
    tpu.vector_store %arg4[%c8, %c0_25], %106 {strides = array<i32>} : memref<16x64xf32, #tpu.memory_space<vmem>>, vector<2x16xf32>,
    %c8_26 = arith.constant 8 : index
    %c16_27 = arith.constant 16 : index
    %115 = vector.load %arg4[%c8_26, %c16_27] : memref<16x64xf32, #tpu.memory_space<vmem>>, vector<2x16xf32>
    tpu.vector_store %arg4[%c8_26, %c16_27], %113 {strides = array<i32>} : memref<16x64xf32, #tpu.memory_space<vmem>>, vector<2x16xf32>,
    %116 = vector.broadcast %5 : vector<1x16xf32> to vector<2x16xf32>
    %117 = arith.mulf %116, %106 : vector<2x16xf32>
    %118 = vector.broadcast %6 : vector<1x16xf32> to vector<2x16xf32>
    %119 = arith.mulf %118, %113 : vector<2x16xf32>
    %120 = arith.subf %117, %119 : vector<2x16xf32>
    %121 = vector.extract_strided_slice %32 {offsets = [10, 0], sizes = [2, 16], strides = [1, 1]} : vector<16x16xf32> to vector<2x16xf32>
    %122 = arith.addf %120, %121 : vector<2x16xf32>
    %123 = vector.broadcast %5 : vector<1x16xf32> to vector<2x16xf32>
    %124 = arith.mulf %123, %113 : vector<2x16xf32>
    %125 = vector.broadcast %6 : vector<1x16xf32> to vector<2x16xf32>
    %126 = arith.mulf %125, %106 : vector<2x16xf32>
    %127 = arith.addf %124, %126 : vector<2x16xf32>
    %128 = vector.extract_strided_slice %33 {offsets = [10, 0], sizes = [2, 16], strides = [1, 1]} : vector<16x16xf32> to vector<2x16xf32>
    %129 = arith.addf %127, %128 : vector<2x16xf32>
    %c10 = arith.constant 10 : index
    %c0_28 = arith.constant 0 : index
    %130 = vector.load %arg4[%c10, %c0_28] : memref<16x64xf32, #tpu.memory_space<vmem>>, vector<2x16xf32>
    tpu.vector_store %arg4[%c10, %c0_28], %122 {strides = array<i32>} : memref<16x64xf32, #tpu.memory_space<vmem>>, vector<2x16xf32>,
    %c10_29 = arith.constant 10 : index
    %c16_30 = arith.constant 16 : index
    %131 = vector.load %arg4[%c10_29, %c16_30] : memref<16x64xf32, #tpu.memory_space<vmem>>, vector<2x16xf32>
    tpu.vector_store %arg4[%c10_29, %c16_30], %129 {strides = array<i32>} : memref<16x64xf32, #tpu.memory_space<vmem>>, vector<2x16xf32>,
    %132 = vector.broadcast %5 : vector<1x16xf32> to vector<2x16xf32>
    %133 = arith.mulf %132, %122 : vector<2x16xf32>
    %134 = vector.broadcast %6 : vector<1x16xf32> to vector<2x16xf32>
    %135 = arith.mulf %134, %129 : vector<2x16xf32>
    %136 = arith.subf %133, %135 : vector<2x16xf32>
    %137 = vector.extract_strided_slice %32 {offsets = [12, 0], sizes = [2, 16], strides = [1, 1]} : vector<16x16xf32> to vector<2x16xf32>
    %138 = arith.addf %136, %137 : vector<2x16xf32>
    %139 = vector.broadcast %5 : vector<1x16xf32> to vector<2x16xf32>
    %140 = arith.mulf %139, %129 : vector<2x16xf32>
    %141 = vector.broadcast %6 : vector<1x16xf32> to vector<2x16xf32>
    %142 = arith.mulf %141, %122 : vector<2x16xf32>
    %143 = arith.addf %140, %142 : vector<2x16xf32>
    %144 = vector.extract_strided_slice %33 {offsets = [12, 0], sizes = [2, 16], strides = [1, 1]} : vector<16x16xf32> to vector<2x16xf32>
    %145 = arith.addf %143, %144 : vector<2x16xf32>
    %c12 = arith.constant 12 : index
    %c0_31 = arith.constant 0 : index
    %146 = vector.load %arg4[%c12, %c0_31] : memref<16x64xf32, #tpu.memory_space<vmem>>, vector<2x16xf32>
    tpu.vector_store %arg4[%c12, %c0_31], %138 {strides = array<i32>} : memref<16x64xf32, #tpu.memory_space<vmem>>, vector<2x16xf32>,
    %c12_32 = arith.constant 12 : index
    %c16_33 = arith.constant 16 : index
    %147 = vector.load %arg4[%c12_32, %c16_33] : memref<16x64xf32, #tpu.memory_space<vmem>>, vector<2x16xf32>
    tpu.vector_store %arg4[%c12_32, %c16_33], %145 {strides = array<i32>} : memref<16x64xf32, #tpu.memory_space<vmem>>, vector<2x16xf32>,
    %148 = vector.broadcast %5 : vector<1x16xf32> to vector<2x16xf32>
    %149 = arith.mulf %148, %138 : vector<2x16xf32>
    %150 = vector.broadcast %6 : vector<1x16xf32> to vector<2x16xf32>
    %151 = arith.mulf %150, %145 : vector<2x16xf32>
    %152 = arith.subf %149, %151 : vector<2x16xf32>
    %153 = vector.extract_strided_slice %32 {offsets = [14, 0], sizes = [2, 16], strides = [1, 1]} : vector<16x16xf32> to vector<2x16xf32>
    %154 = arith.addf %152, %153 : vector<2x16xf32>
    %155 = vector.broadcast %5 : vector<1x16xf32> to vector<2x16xf32>
    %156 = arith.mulf %155, %145 : vector<2x16xf32>
    %157 = vector.broadcast %6 : vector<1x16xf32> to vector<2x16xf32>
    %158 = arith.mulf %157, %138 : vector<2x16xf32>
    %159 = arith.addf %156, %158 : vector<2x16xf32>
    %160 = vector.extract_strided_slice %33 {offsets = [14, 0], sizes = [2, 16], strides = [1, 1]} : vector<16x16xf32> to vector<2x16xf32>
    %161 = arith.addf %159, %160 : vector<2x16xf32>
    %c14 = arith.constant 14 : index
    %c0_34 = arith.constant 0 : index
    %162 = vector.load %arg4[%c14, %c0_34] : memref<16x64xf32, #tpu.memory_space<vmem>>, vector<2x16xf32>
    tpu.vector_store %arg4[%c14, %c0_34], %154 {strides = array<i32>} : memref<16x64xf32, #tpu.memory_space<vmem>>, vector<2x16xf32>,
    %c14_35 = arith.constant 14 : index
    %c16_36 = arith.constant 16 : index
    %163 = vector.load %arg4[%c14_35, %c16_36] : memref<16x64xf32, #tpu.memory_space<vmem>>, vector<2x16xf32>
    tpu.vector_store %arg4[%c14_35, %c16_36], %161 {strides = array<i32>} : memref<16x64xf32, #tpu.memory_space<vmem>>, vector<2x16xf32>,
    %c0_37 = arith.constant 0 : index
    %c0_38 = arith.constant 0 : index
    %164 = vector.load %arg4[%c0_37, %c0_38] : memref<16x64xf32, #tpu.memory_space<vmem>>, vector<16x64xf32>
    %c32_39 = arith.constant 32 : index
    %c0_40 = arith.constant 0 : index
    %165 = vector.load %arg2[%c32_39, %c0_40] : memref<128x32xf32, #tpu.memory_space<vmem>>, vector<64x32xf32>
    %cst_41 = arith.constant dense<0.000000e+00> : vector<16x32xf32>
    %166 = tpu.matmul %164, %165, %cst_41 {dimension_numbers = #tpu.dot_dimension_numbers<[1], [0], [0], [1], [0, 0, 1, 1], [], []>} : vector<16x64xf32>, vector<64x32xf32>, vector<16x32xf32> -> vector<16x32xf32>
    %cst_42 = arith.constant 5.000000e-01 : f32
    %167 = vector.broadcast %cst_42 : f32 to vector<16x32xf32>
    %168 = arith.mulf %167, %166 : vector<16x32xf32>
    %cst_43 = arith.constant 0.707106769 : f32
    %169 = vector.broadcast %cst_43 : f32 to vector<16x32xf32>
    %170 = arith.mulf %166, %169 : vector<16x32xf32>
    %171 = math.erf %170 : vector<16x32xf32>
    %cst_44 = arith.constant 1.000000e+00 : f32
    %172 = vector.broadcast %cst_44 : f32 to vector<16x32xf32>
    %173 = arith.addf %172, %171 : vector<16x32xf32>
    %174 = arith.mulf %168, %173 : vector<16x32xf32>
    %c96 = arith.constant 96 : index
    %c0_45 = arith.constant 0 : index
    %175 = vector.load %arg2[%c96, %c0_45] : memref<128x32xf32, #tpu.memory_space<vmem>>, vector<32x32xf32>
    %cst_46 = arith.constant dense<0.000000e+00> : vector<16x32xf32>
    %176 = tpu.matmul %174, %175, %cst_46 {dimension_numbers = #tpu.dot_dimension_numbers<[1], [0], [0], [1], [0, 0, 1, 1], [], []>} : vector<16x32xf32>, vector<32x32xf32>, vector<16x32xf32> -> vector<16x32xf32>
    %177 = vector.broadcast %4 : vector<1x32xf32> to vector<16x32xf32>
    %178 = arith.addf %176, %177 : vector<16x32xf32>
    %179 = arith.negf %178 : vector<16x32xf32>
    %180 = math.exp %179 : vector<16x32xf32>
    %cst_47 = arith.constant 1.000000e+00 : f32
    %181 = vector.broadcast %cst_47 : f32 to vector<16x32xf32>
    %182 = arith.addf %181, %180 : vector<16x32xf32>
    %183 = arith.divf %181, %182 : vector<16x32xf32>
    %184 = arith.mulf %174, %183 : vector<16x32xf32>
    %185 = arith.addf %184, %0 : vector<16x32xf32>
    %c0_48 = arith.constant 0 : index
    %c0_49 = arith.constant 0 : index
    %186 = vector.load %arg3[%c0_48, %c0_49] : memref<16x32xf32, #tpu.memory_space<vmem>>, vector<16x32xf32>
    tpu.vector_store %arg3[%c0_48, %c0_49], %185 {strides = array<i32>} : memref<16x32xf32, #tpu.memory_space<vmem>>, vector<16x32xf32>,
    return
  }
}

</mosaic_0001>

<llo_original>
// kernel: lru_block_forward.1
$region0: #{lru_block_forward.1}
  #allocation0 [shape = 'u32[]', space=smem, size = 0x4, offset = 0x4, fixed_abs, tag = 'smem constant byte address 0x4 - core index']
  #allocation1 [shape = 'u32[144,128]{1,0:T(1,128)}', space=vmem, size = 0x12000, scoped, tag = 'internal scratch']
  #allocation2 [shape = 'f32[16,64]{1,0:T(8,128)}', space=vmem, size = 0x2000, scoped, tag = 'scratch operand']
  %s0 = inlined_call_operand.vmem [shape: f32[16,32], index: 0, kind: input, shape index: {}]
  %s1 = inlined_call_operand.vmem [shape: f32[5,32], index: 1, kind: input, shape index: {}]
  %s2 = inlined_call_operand.vmem [shape: f32[128,32], index: 2, kind: input, shape index: {}]
  %s3 = inlined_call_operand.vmem [shape: f32[16,32], index: 3, kind: output, shape index: {}]
  %s4 = sld [smem:[#allocation0]]
  $region22: #{lru_block_forward.1} parent=0
    _
  %s6 = ssub.s32 1, %s4
  %s7 = scalar_select 0, %s6, %s4
  // Predicated region
  $region2: #{lru_block_forward.1} parent=0 // pred_check
    _
  $region3: #{lru_block_forward.1} parent=0 // pred_check_branch
    %9 = sbr.rel (0) target = $region5
  $region4: #{lru_block_forward.1} parent=0 // pred_region
    _
  $region5: #{lru_block_forward.1} parent=0 // pred_fallthru
    _
  // Predicated region
  $region6: #{lru_block_forward.1} parent=0 // pred_check
    _
  $region7: #{lru_block_forward.1} parent=0 // pred_check_branch
    %11 = sbr.rel (0) target = $region9
  $region8: #{lru_block_forward.1} parent=0 // pred_region
    _
  $region9: #{lru_block_forward.1} parent=0 // pred_fallthru
    _
  // Predicated region
  $region10: #{lru_block_forward.1} parent=0 // pred_check
    _
  $region11: #{lru_block_forward.1} parent=0 // pred_check_branch
    %13 = sbr.rel (0) target = $region13
  $region12: #{lru_block_forward.1} parent=0 // pred_region
    _
  $region13: #{lru_block_forward.1} parent=0 // pred_fallthru
    _
  %v14 = vld [vmem:[%s0] sm:$0xff]
  %v15 = vld [vmem:[%s0 + $0x8] sm:$0xff]
  %v16 = vld [vmem:[%s1] sm:$0x1f]
  %vm17 = vcmask 261120
  %v18 = vsel %vm17, %v14, 0.0
  %19 = vadd.xlane.f32.xlu0 %v18
  %v20 = vpop.xlane.xlu0 %19
  %v21 = vsel %vm17, %v15, 0.0
  %22 = vadd.xlane.f32.xlu0 %v21
  %v23 = vpop.xlane.xlu0 %22
  %v24 = vrcp.pop 32.0
  %v25 = vmul.f32 %v20, %v24
  %v26 = vmul.f32 %v23, %v24
  %v27 = vsub.f32 %v14, %v25
  %v28 = vsub.f32 %v15, %v26
  %v29 = vmul.f32 %v27, %v27
  %v30 = vmul.f32 %v28, %v28
  %v31 = vsel %vm17, %v29, 0.0
  %32 = vadd.xlane.f32.xlu0 %v31
  %v33 = vpop.xlane.xlu0 %32
  %v34 = vsel %vm17, %v30, 0.0
  %35 = vadd.xlane.f32.xlu0 %v34
  %v36 = vpop.xlane.xlu0 %35
  %v37 = vmul.f32 %v33, %v24
  %v38 = vmul.f32 %v36, %v24
  %v39 = vadd.f32 %v37, 1e-05
  %v40 = vadd.f32 %v38, 1e-05
  %v41 = vrsqrt.pop %v39
  %v42 = vrsqrt.pop %v40
  %v43 = vmul.f32 %v27, %v41
  %v44 = vmul.f32 %v28, %v42
  %v45 = vlaneseq
  %v46 = vshrl.u32 %v45, 7
  %v47 = vsub.s32 0, %v46
  %v48 = vrot.slane %v16, %v47
  %v49 = vmul.f32 %v43, %v48
  %v50 = vmul.f32 %v44, %v48
  %v51 = vlaneseq
  %v52 = vshrl.u32 %v51, 7
  %v53 = vsub.s32 1, %v52
  %v54 = vrot.slane %v16, %v53
  %v55 = vadd.f32 %v49, %v54
  %v56 = vadd.f32 %v50, %v54
  %59 = vrot.lane.b32.xlu0 %v55, 32
  %v60 = vpop.permute.xlu0 %59
  %61 = vrot.lane.b32.xlu0 %v56, 32
  %v62 = vpop.permute.xlu0 %61
  %vm65 = vcmask 523520
  %66 = vst.msk [vmem:[#allocation2] sm:$0xff] %vm65, %v60
  %67 = vst.msk [vmem:[#allocation2 + $0x8] sm:$0xff] %vm65, %v62
  %v68 = vld [vmem:[%s2] sm:$0xff]
  %v69 = vld [vmem:[%s2 + $0x8] sm:$0xff]
  %v70 = vld [vmem:[%s2 + $0x10] sm:$0xff]
  %v71 = vld [vmem:[%s2 + $0x18] sm:$0xff]
  %v72 = vsel %vm17, %v55, 0
  %v74 = vsel %vm17, %v56, 0
  %76 = vmatprep.subr.mxu0 0.0
  %77 = vmatpush1.msra.mxu0 %v68
  %78 = vmatprep.subr.mxu0 0.0
  %79 = vmatpush1.msra.mxu0 %v69
  %80 = vmatprep.subr.mxu0 0.0
  %81 = vmatpush1.msra.mxu0 %v70
  %82 = vmatprep.subr.mxu0 0.0
  %83 = vmatpush1.msra.mxu0 %v71
  %84 = vmatprep.subr.mxu0 0.0
  %85 = vmatpush1.msra.mxu0 0.0
  %86 = vmatprep.subr.mxu0 0.0
  %87 = vmatpush1.msra.mxu0 0.0
  %88 = vmatprep.subr.mxu0 0.0
  %89 = vmatpush1.msra.mxu0 0.0
  %90 = vmatprep.subr.mxu0 0.0
  %91 = vmatpush1.msra.mxu0 0.0
  %92 = vmatprep.subr.mxu0 0.0
  %93 = vmatpush1.msra.mxu0 0.0
  %94 = vmatprep.subr.mxu0 0.0
  %95 = vmatpush1.msra.mxu0 0.0
  %96 = vmatprep.subr.mxu0 0.0
  %97 = vmatpush1.msra.mxu0 0.0
  %98 = vmatprep.subr.mxu0 0.0
  %99 = vmatpush1.msra.mxu0 0.0
  %100 = vmatprep.subr.mxu0 0.0
  %101 = vmatpush1.msra.mxu0 0.0
  %102 = vmatprep.subr.mxu0 0.0
  %103 = vmatpush1.msra.mxu0 0.0
  %104 = vmatprep.subr.mxu0 0.0
  %105 = vmatpush1.msra.mxu0 0.0
  %106 = vmatprep.subr.mxu0 0.0
  %107 = vmatpush1.msra.mxu0 0.0
  %108 = vmatprep.subr.mxu0 0.0
  %109 = vmatpush1.msra.mxu0 0.0
  %110 = vmatprep.subr.mxu0 0.0
  %111 = vmatpush1.msra.mxu0 0.0
  %112 = vmatprep.subr.mxu0 0.0
  %113 = vmatpush1.msra.mxu0 0.0
  %114 = vmatprep.subr.mxu0 0.0
  %115 = vmatpush1.msra.mxu0 0.0
  %116 = vmatprep.subr.mxu0 0.0
  %117 = vmatpush1.msra.mxu0 0.0
  %118 = vmatprep.subr.mxu0 0.0
  %119 = vmatpush1.msra.mxu0 0.0
  %120 = vmatprep.subr.mxu0 0.0
  %121 = vmatpush1.msra.mxu0 0.0
  %122 = vmatprep.subr.mxu0 0.0
  %123 = vmatpush1.msra.mxu0 0.0
  %124 = vmatprep.subr.mxu0 0.0
  %125 = vmatpush1.msra.mxu0 0.0
  %126 = vmatprep.subr.mxu0 0.0
  %127 = vmatpush1.msra.mxu0 0.0
  %128 = vmatprep.subr.mxu0 0.0
  %129 = vmatpush1.msra.mxu0 0.0
  %130 = vmatprep.subr.mxu0 0.0
  %131 = vmatpush1.msra.mxu0 0.0
  %132 = vmatprep.subr.mxu0 0.0
  %133 = vmatpush1.msra.mxu0 0.0
  %134 = vmatprep.subr.mxu0 0.0
  %135 = vmatpush1.msra.mxu0 0.0
  %136 = vmatprep.subr.mxu0 0.0
  %137 = vmatpush1.msra.mxu0 0.0
  %138 = vmatprep.subr.mxu0 0.0
  %139 = vmatpush1.msra.mxu0 0.0
  %140 = vmatprep.mubr.f32.mxu0 0.0
  %141 = vmatmul.mubr.f32.gmra.mrb[0].mxu0 %v72
  %v142 = vpop.f32.mrb[0].mxu0
  %v143 = vadd.f32 0.0, %v142
  %v144 = vpop.f32.mrb[0].mxu0
  %145 = vmatprep.mubr.f32.mxu0 0.0
  %146 = vmatmul.mubr.f32.gmra.mrb[0].mxu0 %v74
  %v147 = vpop.f32.mrb[0].mxu0
  %v148 = vadd.f32 0.0, %v147
  %v149 = vpop.f32.mrb[0].mxu0
  %150 = vdwg.mxu0
  %v151 = vlaneseq
  %v152 = vshrl.u32 %v151, 7
  %v153 = vsub.s32 3, %v152
  %v154 = vrot.slane %v16, %v153
  %v155 = vmul.f32 %v154, 0.0
  %v156 = vlaneseq
  %v157 = vshrl.u32 %v156, 7
  %v158 = vsub.s32 4, %v157
  %v159 = vrot.slane %v16, %v158
  %v160 = vmul.f32 %v159, 0.0
  %v161 = vsub.f32 %v155, %v160
  %v162 = vadd.f32 %v161, %v143
  %v163 = vadd.f32 %v155, %v160
  %165 = vrot.lane.b32.xlu0 %v143, 112
  %v166 = vpop.permute.xlu0 %165
  %v168 = vadd.f32 %v163, %v166
  %vm169 = vcmask 123904
  %170 = vst.msk [vmem:[#allocation2] sm:$0x3] %vm169, %v162
  %172 = vrot.lane.b32.xlu0 %v168, 16
  %v173 = vpop.permute.xlu0 %172
  %vm175 = vcmask 255104
  %176 = vst.msk [vmem:[#allocation2] sm:$0x3] %vm175, %v173
  %v177 = vmul.f32 %v154, %v162
  %v178 = vmul.f32 %v159, %v168
  %v179 = vsub.f32 %v177, %v178
  %v180 = vrot.slane %v143, 2
  %v182 = vadd.f32 %v179, %v180
  %v183 = vmul.f32 %v154, %v168
  %v184 = vmul.f32 %v159, %v162
  %v185 = vadd.f32 %v183, %v184
  %186 = vrot.lane.b32.xlu0 %v180, 112
  %v187 = vpop.permute.xlu0 %186
  %v189 = vadd.f32 %v185, %v187
  %190 = vst.msk [vmem:[#allocation2 + $0x2] sm:$0x3] %vm169, %v182
  %192 = vrot.lane.b32.xlu0 %v189, 16
  %v193 = vpop.permute.xlu0 %192
  %195 = vst.msk [vmem:[#allocation2 + $0x2] sm:$0x3] %vm175, %v193
  %v196 = vmul.f32 %v154, %v182
  %v197 = vmul.f32 %v159, %v189
  %v198 = vsub.f32 %v196, %v197
  %v199 = vrot.slane %v143, 4
  %v201 = vadd.f32 %v198, %v199
  %v202 = vmul.f32 %v154, %v189
  %v203 = vmul.f32 %v159, %v182
  %v204 = vadd.f32 %v202, %v203
  %205 = vrot.lane.b32.xlu0 %v199, 112
  %v206 = vpop.permute.xlu0 %205
  %v208 = vadd.f32 %v204, %v206
  %209 = vst.msk [vmem:[#allocation2 + $0x4] sm:$0x3] %vm169, %v201
  %211 = vrot.lane.b32.xlu0 %v208, 16
  %v212 = vpop.permute.xlu0 %211
  %214 = vst.msk [vmem:[#allocation2 + $0x4] sm:$0x3] %vm175, %v212
  %v215 = vmul.f32 %v154, %v201
  %v216 = vmul.f32 %v159, %v208
  %v217 = vsub.f32 %v215, %v216
  %v218 = vrot.slane %v143, 6
  %v220 = vadd.f32 %v217, %v218
  %v221 = vmul.f32 %v154, %v208
  %v222 = vmul.f32 %v159, %v201
  %v223 = vadd.f32 %v221, %v222
  %224 = vrot.lane.b32.xlu0 %v218, 112
  %v225 = vpop.permute.xlu0 %224
  %v227 = vadd.f32 %v223, %v225
  %228 = vst.msk [vmem:[#allocation2 + $0x6] sm:$0x3] %vm169, %v220
  %230 = vrot.lane.b32.xlu0 %v227, 16
  %v231 = vpop.permute.xlu0 %230
  %233 = vst.msk [vmem:[#allocation2 + $0x6] sm:$0x3] %vm175, %v231
  %v234 = vmul.f32 %v154, %v220
  %v235 = vmul.f32 %v159, %v227
  %v236 = vsub.f32 %v234, %v235
  %v237 = vadd.f32 %v236, %v148
  %v238 = vmul.f32 %v154, %v227
  %v239 = vmul.f32 %v159, %v220
  %v240 = vadd.f32 %v238, %v239
  %242 = vrot.lane.b32.xlu0 %v148, 112
  %v243 = vpop.permute.xlu0 %242
  %v245 = vadd.f32 %v240, %v243
  %246 = vst.msk [vmem:[#allocation2 + $0x8] sm:$0x3] %vm169, %v237
  %248 = vrot.lane.b32.xlu0 %v245, 16
  %v249 = vpop.permute.xlu0 %248
  %251 = vst.msk [vmem:[#allocation2 + $0x8] sm:$0x3] %vm175, %v249
  %v252 = vmul.f32 %v154, %v237
  %v253 = vmul.f32 %v159, %v245
  %v254 = vsub.f32 %v252, %v253
  %v255 = vrot.slane %v148, 2
  %v257 = vadd.f32 %v254, %v255
  %v258 = vmul.f32 %v154, %v245
  %v259 = vmul.f32 %v159, %v237
  %v260 = vadd.f32 %v258, %v259
  %261 = vrot.lane.b32.xlu0 %v255, 112
  %v262 = vpop.permute.xlu0 %261
  %v264 = vadd.f32 %v260, %v262
  %265 = vst.msk [vmem:[#allocation2 + $0xa] sm:$0x3] %vm169, %v257
  %267 = vrot.lane.b32.xlu0 %v264, 16
  %v268 = vpop.permute.xlu0 %267
  %270 = vst.msk [vmem:[#allocation2 + $0xa] sm:$0x3] %vm175, %v268
  %v271 = vmul.f32 %v154, %v257
  %v272 = vmul.f32 %v159, %v264
  %v273 = vsub.f32 %v271, %v272
  %v274 = vrot.slane %v148, 4
  %v276 = vadd.f32 %v273, %v274
  %v277 = vmul.f32 %v154, %v264
  %v278 = vmul.f32 %v159, %v257
  %v279 = vadd.f32 %v277, %v278
  %280 = vrot.lane.b32.xlu0 %v274, 112
  %v281 = vpop.permute.xlu0 %280
  %v283 = vadd.f32 %v279, %v281
  %284 = vst.msk [vmem:[#allocation2 + $0xc] sm:$0x3] %vm169, %v276
  %286 = vrot.lane.b32.xlu0 %v283, 16
  %v287 = vpop.permute.xlu0 %286
  %289 = vst.msk [vmem:[#allocation2 + $0xc] sm:$0x3] %vm175, %v287
  %v290 = vmul.f32 %v154, %v276
  %v291 = vmul.f32 %v159, %v283
  %v292 = vsub.f32 %v290, %v291
  %v293 = vrot.slane %v148, 6
  %v295 = vadd.f32 %v292, %v293
  %v296 = vmul.f32 %v154, %v283
  %v297 = vmul.f32 %v159, %v276
  %v298 = vadd.f32 %v296, %v297
  %299 = vrot.lane.b32.xlu0 %v293, 112
  %v300 = vpop.permute.xlu0 %299
  %v302 = vadd.f32 %v298, %v300
  %303 = vst.msk [vmem:[#allocation2 + $0xe] sm:$0x3] %vm169, %v295
  %305 = vrot.lane.b32.xlu0 %v302, 16
  %v306 = vpop.permute.xlu0 %305
  %308 = vst.msk [vmem:[#allocation2 + $0xe] sm:$0x3] %vm175, %v306
  %v309 = vld [vmem:[#allocation2] sm:$0xff]
  %v310 = vld [vmem:[#allocation2 + $0x8] sm:$0xff]
  %v311 = vld [vmem:[%s2 + $0x20] sm:$0xff]
  %v312 = vld [vmem:[%s2 + $0x28] sm:$0xff]
  %v313 = vld [vmem:[%s2 + $0x30] sm:$0xff]
  %v314 = vld [vmem:[%s2 + $0x38] sm:$0xff]
  %v315 = vld [vmem:[%s2 + $0x40] sm:$0xff]
  %v316 = vld [vmem:[%s2 + $0x48] sm:$0xff]
  %v317 = vld [vmem:[%s2 + $0x50] sm:$0xff]
  %v318 = vld [vmem:[%s2 + $0x58] sm:$0xff]
  %vm319 = vcmask 523264
  %v321 = vsel %vm319, %v309, 0
  %v324 = vsel %vm319, %v310, 0
  %326 = vmatprep.subr.mxu0 0.0
  %327 = vmatpush1.msra.mxu0 %v311
  %328 = vmatprep.subr.mxu0 0.0
  %329 = vmatpush1.msra.mxu0 %v312
  %330 = vmatprep.subr.mxu0 0.0
  %331 = vmatpush1.msra.mxu0 %v313
  %332 = vmatprep.subr.mxu0 0.0
  %333 = vmatpush1.msra.mxu0 %v314
  %334 = vmatprep.subr.mxu0 0.0
  %335 = vmatpush1.msra.mxu0 %v315
  %336 = vmatprep.subr.mxu0 0.0
  %337 = vmatpush1.msra.mxu0 %v316
  %338 = vmatprep.subr.mxu0 0.0
  %339 = vmatpush1.msra.mxu0 %v317
  %340 = vmatprep.subr.mxu0 0.0
  %341 = vmatpush1.msra.mxu0 %v318
  %342 = vmatprep.subr.mxu0 0.0
  %343 = vmatpush1.msra.mxu0 0.0
  %344 = vmatprep.subr.mxu0 0.0
  %345 = vmatpush1.msra.mxu0 0.0
  %346 = vmatprep.subr.mxu0 0.0
  %347 = vmatpush1.msra.mxu0 0.0
  %348 = vmatprep.subr.mxu0 0.0
  %349 = vmatpush1.msra.mxu0 0.0
  %350 = vmatprep.subr.mxu0 0.0
  %351 = vmatpush1.msra.mxu0 0.0
  %352 = vmatprep.subr.mxu0 0.0
  %353 = vmatpush1.msra.mxu0 0.0
  %354 = vmatprep.subr.mxu0 0.0
  %355 = vmatpush1.msra.mxu0 0.0
  %356 = vmatprep.subr.mxu0 0.0
  %357 = vmatpush1.msra.mxu0 0.0
  %358 = vmatprep.subr.mxu0 0.0
  %359 = vmatpush1.msra.mxu0 0.0
  %360 = vmatprep.subr.mxu0 0.0
  %361 = vmatpush1.msra.mxu0 0.0
  %362 = vmatprep.subr.mxu0 0.0
  %363 = vmatpush1.msra.mxu0 0.0
  %364 = vmatprep.subr.mxu0 0.0
  %365 = vmatpush1.msra.mxu0 0.0
  %366 = vmatprep.subr.mxu0 0.0
  %367 = vmatpush1.msra.mxu0 0.0
  %368 = vmatprep.subr.mxu0 0.0
  %369 = vmatpush1.msra.mxu0 0.0
  %370 = vmatprep.subr.mxu0 0.0
  %371 = vmatpush1.msra.mxu0 0.0
  %372 = vmatprep.subr.mxu0 0.0
  %373 = vmatpush1.msra.mxu0 0.0
  %374 = vmatprep.subr.mxu0 0.0
  %375 = vmatpush1.msra.mxu0 0.0
  %376 = vmatprep.subr.mxu0 0.0
  %377 = vmatpush1.msra.mxu0 0.0
  %378 = vmatprep.subr.mxu0 0.0
  %379 = vmatpush1.msra.mxu0 0.0
  %380 = vmatprep.subr.mxu0 0.0
  %381 = vmatpush1.msra.mxu0 0.0
  %382 = vmatprep.subr.mxu0 0.0
  %383 = vmatpush1.msra.mxu0 0.0
  %384 = vmatprep.subr.mxu0 0.0
  %385 = vmatpush1.msra.mxu0 0.0
  %386 = vmatprep.subr.mxu0 0.0
  %387 = vmatpush1.msra.mxu0 0.0
  %388 = vmatprep.subr.mxu0 0.0
  %389 = vmatpush1.msra.mxu0 0.0
  %390 = vmatprep.mubr.f32.mxu0 0.0
  %391 = vmatmul.mubr.f32.gmra.mrb[0].mxu0 %v321
  %v392 = vpop.f32.mrb[0].mxu0
  %v393 = vadd.f32 0.0, %v392
  %v394 = vpop.f32.mrb[0].mxu0
  %395 = vmatprep.mubr.f32.mxu0 0.0
  %396 = vmatmul.mubr.f32.gmra.mrb[0].mxu0 %v324
  %v397 = vpop.f32.mrb[0].mxu0
  %v398 = vadd.f32 0.0, %v397
  %v399 = vpop.f32.mrb[0].mxu0
  %400 = vdwg.mxu0
  %v401 = vmul.f32 %v393, 0.5
  %v402 = vmul.f32 %v398, 0.5
  %v403 = vmul.f32 %v393, 0.70710677
  %v404 = vmul.f32 %v398, 0.70710677
  %v405 = verf.f32.pop %v403
  %v406 = verf.f32.pop %v404
  %v407 = vadd.f32 %v405, 1.0
  %v408 = vadd.f32 %v406, 1.0
  %v409 = vmul.f32 %v401, %v407
  %v410 = vmul.f32 %v402, %v408
  %v411 = vld [vmem:[%s2 + $0x60] sm:$0xff]
  %v412 = vld [vmem:[%s2 + $0x68] sm:$0xff]
  %v413 = vld [vmem:[%s2 + $0x70] sm:$0xff]
  %v414 = vld [vmem:[%s2 + $0x78] sm:$0xff]
  %v415 = vlaneseq
  %v416 = vshrl.u32 %v415, 7
  %v417 = vsub.s32 2, %v416
  %v418 = vrot.slane %v16, %v417
  %v420 = vsel %vm17, %v409, 0
  %v423 = vsel %vm17, %v410, 0
  %425 = vmatprep.subr.mxu0 0.0
  %426 = vmatpush1.msra.mxu0 %v411
  %427 = vmatprep.subr.mxu0 0.0
  %428 = vmatpush1.msra.mxu0 %v412
  %429 = vmatprep.subr.mxu0 0.0
  %430 = vmatpush1.msra.mxu0 %v413
  %431 = vmatprep.subr.mxu0 0.0
  %432 = vmatpush1.msra.mxu0 %v414
  %433 = vmatprep.subr.mxu0 0.0
  %434 = vmatpush1.msra.mxu0 0.0
  %435 = vmatprep.subr.mxu0 0.0
  %436 = vmatpush1.msra.mxu0 0.0
  %437 = vmatprep.subr.mxu0 0.0
  %438 = vmatpush1.msra.mxu0 0.0
  %439 = vmatprep.subr.mxu0 0.0
  %440 = vmatpush1.msra.mxu0 0.0
  %441 = vmatprep.subr.mxu0 0.0
  %442 = vmatpush1.msra.mxu0 0.0
  %443 = vmatprep.subr.mxu0 0.0
  %444 = vmatpush1.msra.mxu0 0.0
  %445 = vmatprep.subr.mxu0 0.0
  %446 = vmatpush1.msra.mxu0 0.0
  %447 = vmatprep.subr.mxu0 0.0
  %448 = vmatpush1.msra.mxu0 0.0
  %449 = vmatprep.subr.mxu0 0.0
  %450 = vmatpush1.msra.mxu0 0.0
  %451 = vmatprep.subr.mxu0 0.0
  %452 = vmatpush1.msra.mxu0 0.0
  %453 = vmatprep.subr.mxu0 0.0
  %454 = vmatpush1.msra.mxu0 0.0
  %455 = vmatprep.subr.mxu0 0.0
  %456 = vmatpush1.msra.mxu0 0.0
  %457 = vmatprep.subr.mxu0 0.0
  %458 = vmatpush1.msra.mxu0 0.0
  %459 = vmatprep.subr.mxu0 0.0
  %460 = vmatpush1.msra.mxu0 0.0
  %461 = vmatprep.subr.mxu0 0.0
  %462 = vmatpush1.msra.mxu0 0.0
  %463 = vmatprep.subr.mxu0 0.0
  %464 = vmatpush1.msra.mxu0 0.0
  %465 = vmatprep.subr.mxu0 0.0
  %466 = vmatpush1.msra.mxu0 0.0
  %467 = vmatprep.subr.mxu0 0.0
  %468 = vmatpush1.msra.mxu0 0.0
  %469 = vmatprep.subr.mxu0 0.0
  %470 = vmatpush1.msra.mxu0 0.0
  %471 = vmatprep.subr.mxu0 0.0
  %472 = vmatpush1.msra.mxu0 0.0
  %473 = vmatprep.subr.mxu0 0.0
  %474 = vmatpush1.msra.mxu0 0.0
  %475 = vmatprep.subr.mxu0 0.0
  %476 = vmatpush1.msra.mxu0 0.0
  %477 = vmatprep.subr.mxu0 0.0
  %478 = vmatpush1.msra.mxu0 0.0
  %479 = vmatprep.subr.mxu0 0.0
  %480 = vmatpush1.msra.mxu0 0.0
  %481 = vmatprep.subr.mxu0 0.0
  %482 = vmatpush1.msra.mxu0 0.0
  %483 = vmatprep.subr.mxu0 0.0
  %484 = vmatpush1.msra.mxu0 0.0
  %485 = vmatprep.subr.mxu0 0.0
  %486 = vmatpush1.msra.mxu0 0.0
  %487 = vmatprep.subr.mxu0 0.0
  %488 = vmatpush1.msra.mxu0 0.0
  %489 = vmatprep.mubr.f32.mxu0 0.0
  %490 = vmatmul.mubr.f32.gmra.mrb[0].mxu0 %v420
  %v491 = vpop.f32.mrb[0].mxu0
  %v492 = vadd.f32 %v418, %v491
  %v493 = vpop.f32.mrb[0].mxu0
  %494 = vmatprep.mubr.f32.mxu0 0.0
  %495 = vmatmul.mubr.f32.gmra.mrb[0].mxu0 %v423
  %v496 = vpop.f32.mrb[0].mxu0
  %v497 = vadd.f32 %v418, %v496
  %v498 = vpop.f32.mrb[0].mxu0
  %499 = vdwg.mxu0
  %v500 = vxor.u32 %v492, 2147483648
  %v501 = vxor.u32 %v497, 2147483648
  %v502 = vmul.f32 %v500, 1.442695
  %v503 = vpow.pop %v502
  %v504 = vmul.f32 %v501, 1.442695
  %v505 = vpow.pop %v504
  %v506 = vadd.f32 %v503, 1.0
  %v507 = vadd.f32 %v505, 1.0
  %v508 = vrcp.pop %v506
  %v509 = vmul.f32 1.0, %v508
  %v510 = vrcp.pop %v507
  %v511 = vmul.f32 1.0, %v510
  %v512 = vmul.f32 %v409, %v509
  %v513 = vmul.f32 %v410, %v511
  %v514 = vadd.f32 %v512, %v14
  %v515 = vadd.f32 %v513, %v15
  %516 = vst.msk [vmem:[%s3] sm:$0xff] %vm17, %v514
  %517 = vst.msk [vmem:[%s3 + $0x8] sm:$0xff] %vm17, %v515
  // Predicated region
  $region14: #{lru_block_forward.1} parent=0 // pred_check
    _
  $region15: #{lru_block_forward.1} parent=0 // pred_check_branch
    %519 = sbr.rel (0) target = $region17
  $region16: #{lru_block_forward.1} parent=0 // pred_region
    _
  $region17: #{lru_block_forward.1} parent=0 // pred_fallthru
    _
  // Predicated region
  $region18: #{lru_block_forward.1} parent=0 // pred_check
    _
  $region19: #{lru_block_forward.1} parent=0 // pred_check_branch
    %521 = sbr.rel (0) target = $region21
  $region20: #{lru_block_forward.1} parent=0 // pred_region
    _
  $region21: #{lru_block_forward.1} parent=0 // pred_fallthru
    _

</llo_original>
